<compile_context>
chip_gen: v6e
topology: v6e:2x2x1
jax: 0.10.0
libtpu: 0.0.40
codegen_flags: <defaults>
</compile_context>

<pallas_src>
import jax
import jax.numpy as jnp
from jax.experimental import pallas as pl
from jax.experimental.pallas import tpu as pltpu


def _postprocess_kernel(x_ref, w1_ref, b1_ref, w2_ref, b2_ref, out_ref):
    # x_ref:  (1, C_skip, Tt)    time on the lane axis
    # w1_ref: (C_end, C_skip)    b1_ref: (C_end, 1)
    # w2_ref: (C_out, C_end)     b2_ref: (C_out, 1)
    # out_ref:(1, C_out, Tt)
    h = jnp.maximum(x_ref[0], 0.0)                                  # relu(x)
    h = jnp.dot(w1_ref[...], h, preferred_element_type=jnp.float32) + b1_ref[...]
    h = jnp.maximum(h, 0.0)                                         # relu(conv1)
    y = jnp.dot(w2_ref[...], h, preferred_element_type=jnp.float32) + b2_ref[...]
    out_ref[0] = jax.nn.sigmoid(y).astype(out_ref.dtype)            # sigmoid(conv2)


def _pick_time_tile(T, max_tile=2048):
    """Largest multiple-of-128 divisor of T (capped at max_tile); else full T."""
    if T % 128 == 0:
        tile = min(max_tile, T)
        tile -= tile % 128
        while tile >= 128:
            if T % tile == 0:
                return tile
            tile -= 128
    return T


def postprocess_forward(x_nct, params):
    """x_nct: (B, C_skip, T) float32.  Returns (B, C_out, T), matching PyTorch."""
    B, c_skip, T = x_nct.shape

    # Conv1d weights are (out, in, 1) in PyTorch -> (out, in); biases -> (C, 1).
    w1 = params["w1"][:, :, 0]
    b1 = params["b1"][:, None]
    w2 = params["w2"][:, :, 0]
    b2 = params["b2"][:, None]
    c_end = w1.shape[0]
    c_out = w2.shape[0]
    dtype = x_nct.dtype

    t_tile = _pick_time_tile(T)
    grid = (B, T // t_tile)

    def full_spec(a):
        return pl.BlockSpec(a.shape, lambda b, t: (0,) * a.ndim)

    cost = pl.CostEstimate(
        flops=2 * B * T * (c_skip * c_end + c_end * c_out),
        transcendentals=B * T * c_out,               # sigmoid
        bytes_accessed=4 * B * T * (c_skip + c_out),
    )

    out = pl.pallas_call(
        _postprocess_kernel,
        out_shape=jax.ShapeDtypeStruct((B, c_out, T), dtype),
        grid=grid,
        in_specs=[
            pl.BlockSpec((1, c_skip, t_tile), lambda b, t: (b, 0, t)),
            full_spec(w1), full_spec(b1),
            full_spec(w2), full_spec(b2),
        ],
        out_specs=pl.BlockSpec((1, c_out, t_tile), lambda b, t: (b, 0, t)),
        compiler_params=pltpu.CompilerParams(
            dimension_semantics=("parallel", "parallel"),
            vmem_limit_bytes=64 * 1024 * 1024,
        ),
        cost_estimate=cost,
    )(x_nct, w1, b1, w2, b2)
    return out


def _reference_forward(x_nct, params):
    """Pure-JAX reference matching the PyTorch module."""
    w1 = params["w1"][:, :, 0]
    b1 = params["b1"]
    w2 = params["w2"][:, :, 0]
    b2 = params["b2"]
    h = jnp.maximum(x_nct, 0.0)
    h = jnp.einsum("oc,bct->bot", w1, h) + b1[None, :, None]
    h = jnp.maximum(h, 0.0)
    y = jnp.einsum("oc,bct->bot", w2, h) + b2[None, :, None]
    return jax.nn.sigmoid(y)


if __name__ == "__main__":
    # Small shapes consistent with the module's Conv1d signatures.
    skip_channels = 8
    end_channels = 16
    out_channels = 4
    B, T = 2, 256     # T multiple of 128 -> lane-dense tiled path

    key = jax.random.PRNGKey(0)
    keys = jax.random.split(key, 5)

    params = {
        "w1": jax.random.normal(keys[0], (end_channels, skip_channels, 1), jnp.float32) * 0.3,
        "b1": jax.random.normal(keys[1], (end_channels,), jnp.float32) * 0.1,
        "w2": jax.random.normal(keys[2], (out_channels, end_channels, 1), jnp.float32) * 0.3,
        "b2": jax.random.normal(keys[3], (out_channels,), jnp.float32) * 0.1,
    }

    x = jax.random.normal(keys[4], (B, skip_channels, T), jnp.float32)

    out = postprocess_forward(x, params)
    out = jax.block_until_ready(out)

    ref = _reference_forward(x, params)

    assert out.shape == (B, out_channels, T), out.shape
    assert jnp.allclose(out, ref, atol=1e-5, rtol=1e-5)

    print("KERNEL_OK")
</pallas_src>

<mosaic_0001>
module attributes {stable_mosaic.version = 11 : i64} {
  func.func @_postprocess_kernel(%arg0: i32, %arg1: i32, %arg2: memref<1x8x256xf32, #tpu.memory_space<vmem>>, %arg3: memref<16x8xf32, #tpu.memory_space<vmem>>, %arg4: memref<16x1xf32, #tpu.memory_space<vmem>>, %arg5: memref<4x16xf32, #tpu.memory_space<vmem>>, %arg6: memref<4x1xf32, #tpu.memory_space<vmem>>, %arg7: memref<1x4x256xf32, #tpu.memory_space<vmem>>) attributes {dimension_semantics = [#tpu.dimension_semantics<parallel>, #tpu.dimension_semantics<parallel>], iteration_bounds = array<i64: 2, 1>, scalar_prefetch = 0 : i64, scratch_operands = 0 : i64, tpu.core_type = #tpu.core_type<tc>, window_params = [{transform_indices = @transform_0, window_bounds = array<i64: 1, 8, 256>}, {pipeline_mode = #tpu.pipeline_mode<synchronous>, transform_indices = @transform_1, window_bounds = array<i64: 16, 8>}, {pipeline_mode = #tpu.pipeline_mode<synchronous>, transform_indices = @transform_2, window_bounds = array<i64: 16, 1>}, {pipeline_mode = #tpu.pipeline_mode<synchronous>, transform_indices = @transform_3, window_bounds = array<i64: 4, 16>}, {pipeline_mode = #tpu.pipeline_mode<synchronous>, transform_indices = @transform_4, window_bounds = array<i64: 4, 1>}, {transform_indices = @transform_5, window_bounds = array<i64: 1, 4, 256>}]} {
    %c0 = arith.constant 0 : index
    %c0_0 = arith.constant 0 : index
    %c0_1 = arith.constant 0 : index
    %0 = vector.load %arg2[%c0, %c0_0, %c0_1] : memref<1x8x256xf32, #tpu.memory_space<vmem>>, vector<1x8x256xf32>
    %1 = vector.shape_cast %0 : vector<1x8x256xf32> to vector<8x256xf32>
    %cst = arith.constant 0.000000e+00 : f32
    %2 = vector.broadcast %cst : f32 to vector<8x256xf32>
    %3 = arith.maximumf %1, %2 : vector<8x256xf32>
    %c0_2 = arith.constant 0 : index
    %c0_3 = arith.constant 0 : index
    %4 = vector.load %arg3[%c0_2, %c0_3] : memref<16x8xf32, #tpu.memory_space<vmem>>, vector<16x8xf32>
    %cst_4 = arith.constant dense<0.000000e+00> : vector<16x256xf32>
    %5 = tpu.matmul %4, %3, %cst_4 {dimension_numbers = #tpu.dot_dimension_numbers<[1], [0], [0], [1], [0, 0, 1, 1], [], []>} : vector<16x8xf32>, vector<8x256xf32>, vector<16x256xf32> -> vector<16x256xf32>
    %c0_5 = arith.constant 0 : index
    %c0_6 = arith.constant 0 : index
    %6 = vector.load %arg4[%c0_5, %c0_6] : memref<16x1xf32, #tpu.memory_space<vmem>>, vector<16x1xf32>
    %7 = vector.broadcast %6 : vector<16x1xf32> to vector<16x256xf32>
    %8 = arith.addf %5, %7 : vector<16x256xf32>
    %cst_7 = arith.constant 0.000000e+00 : f32
    %9 = vector.broadcast %cst_7 : f32 to vector<16x256xf32>
    %10 = arith.maximumf %8, %9 : vector<16x256xf32>
    %c0_8 = arith.constant 0 : index
    %c0_9 = arith.constant 0 : index
    %11 = vector.load %arg5[%c0_8, %c0_9] : memref<4x16xf32, #tpu.memory_space<vmem>>, vector<4x16xf32>
    %cst_10 = arith.constant dense<0.000000e+00> : vector<4x256xf32>
    %12 = tpu.matmul %11, %10, %cst_10 {dimension_numbers = #tpu.dot_dimension_numbers<[1], [0], [0], [1], [0, 0, 1, 1], [], []>} : vector<4x16xf32>, vector<16x256xf32>, vector<4x256xf32> -> vector<4x256xf32>
    %c0_11 = arith.constant 0 : index
    %c0_12 = arith.constant 0 : index
    %13 = vector.load %arg6[%c0_11, %c0_12] : memref<4x1xf32, #tpu.memory_space<vmem>>, vector<4x1xf32>
    %14 = vector.broadcast %13 : vector<4x1xf32> to vector<4x256xf32>
    %15 = arith.addf %12, %14 : vector<4x256xf32>
    %16 = arith.negf %15 : vector<4x256xf32>
    %17 = math.exp %16 : vector<4x256xf32>
    %cst_13 = arith.constant 1.000000e+00 : f32
    %18 = vector.broadcast %cst_13 : f32 to vector<4x256xf32>
    %19 = arith.addf %18, %17 : vector<4x256xf32>
    %20 = arith.divf %18, %19 : vector<4x256xf32>
    %c0_14 = arith.constant 0 : index
    %c0_15 = arith.constant 0 : index
    %c0_16 = arith.constant 0 : index
    %21 = vector.load %arg7[%c0_14, %c0_15, %c0_16] : memref<1x4x256xf32, #tpu.memory_space<vmem>>, vector<1x4x256xf32>
    %22 = vector.shape_cast %21 : vector<1x4x256xf32> to vector<4x256xf32>
    %23 = vector.shape_cast %20 : vector<4x256xf32> to vector<1x4x256xf32>
    tpu.vector_store %arg7[%c0_14, %c0_15, %c0_16], %23 {strides = array<i32>} : memref<1x4x256xf32, #tpu.memory_space<vmem>>, vector<1x4x256xf32>,
    return
  }
  func.func @transform_0(%arg0: i32, %arg1: i32) -> (i32, i32, i32) {
    %c0_i32 = arith.constant 0 : i32
    %c0_i32_0 = arith.constant 0 : i32
    return %arg0, %c0_i32, %arg1 : i32, i32, i32
  }
  func.func @transform_1(%arg0: i32, %arg1: i32) -> (i32, i32) {
    %c0_i32 = arith.constant 0 : i32
    %c0_i32_0 = arith.constant 0 : i32
    %c0_i32_1 = arith.constant 0 : i32
    return %c0_i32, %c0_i32_0 : i32, i32
  }
  func.func @transform_2(%arg0: i32, %arg1: i32) -> (i32, i32) {
    %c0_i32 = arith.constant 0 : i32
    %c0_i32_0 = arith.constant 0 : i32
    %c0_i32_1 = arith.constant 0 : i32
    return %c0_i32, %c0_i32_0 : i32, i32
  }
  func.func @transform_3(%arg0: i32, %arg1: i32) -> (i32, i32) {
    %c0_i32 = arith.constant 0 : i32
    %c0_i32_0 = arith.constant 0 : i32
    %c0_i32_1 = arith.constant 0 : i32
    return %c0_i32, %c0_i32_0 : i32, i32
  }
  func.func @transform_4(%arg0: i32, %arg1: i32) -> (i32, i32) {
    %c0_i32 = arith.constant 0 : i32
    %c0_i32_0 = arith.constant 0 : i32
    %c0_i32_1 = arith.constant 0 : i32
    return %c0_i32, %c0_i32_0 : i32, i32
  }
  func.func @transform_5(%arg0: i32, %arg1: i32) -> (i32, i32, i32) {
    %c0_i32 = arith.constant 0 : i32
    %c0_i32_0 = arith.constant 0 : i32
    return %arg0, %c0_i32, %arg1 : i32, i32, i32
  }
}

</mosaic_0001>

<llo_original>
// kernel: tpu_custom_call.1
$region0: #{tpu_custom_call.1}
  #allocation0 [shape = 'u32[]', space=smem, size = 0x4, offset = 0x4, fixed_abs, tag = 'smem constant byte address 0x4 - core index']
  #allocation1 [shape = 'u32[144,128]{1,0:T(1,128)}', space=vmem, size = 0x12000, scoped, tag = 'internal scratch']
  %s0 = inlined_call_operand.vmem [shape: f32[2,8,256], index: 0, kind: input, shape index: {}]
  %s1 = inlined_call_operand.vmem [shape: f32[16,8], index: 1, kind: input, shape index: {}]
  %s2 = inlined_call_operand.vmem [shape: f32[16,1], index: 2, kind: input, shape index: {}]
  %s3 = inlined_call_operand.vmem [shape: f32[4,16], index: 3, kind: input, shape index: {}]
  %s4 = inlined_call_operand.vmem [shape: f32[4,1], index: 4, kind: input, shape index: {}]
  %s5 = inlined_call_operand.hbm [shape: f32[2,4,256], index: 5, kind: output, shape index: {}]
  %s6 = sld [smem:[#allocation0]]
  $region53: #{tpu_custom_call.1} parent=0
    _
  %s8 = ssub.s32 1, %s6
  %s9 = scalar_select 0, %s8, %s6
  $region1: #{tpu_custom_call.1} parent=0
    #allocation2 [shape = 'u8[8192]{0}', space=vmem, size = 0x2000, scoped, tag = 'output window, operand 0']
    #allocation3 [shape = 's32[2]{0}', space=sflag, size = 0x8, scoped, tag = 'scoped memory for tpu_custom_call.1']
    %10 = vsyncpa [#allocation3], 0
    %s11 = scalar_lea.sflag [#allocation3], 1
    %12 = vsyncpa %s11, 0
    loop: start=0, step=1, limit=4
    $region2: #{tpu_custom_call.1} parent=1 // loop_pre_header
      _
    $region3: #{tpu_custom_call.1} parent=1 // loop_header
      %s14 = sphi 0, %s18
      %p15 = scmp.ge.s32.totalorder %s14, 4
      %s21 = sphi 0, %s33
      %s22 = sphi 0, %s29
      %s23 = sphi 0, %s21
      %s24 = sphi 0, %s22
      %s25 = sphi 0, %s23
      %s26 = sphi 0, %s24
      %s38 = sphi 0, %s40
      %s41 = sphi 0, %s38
      %s42 = sphi 0, %s41
      %s58 = sphi 0, %s42
      %s62 = sphi 0, %s62
      %s64 = sphi 0, %s62
      %s65 = sphi 0, %s64
      %s79 = sphi 0, %s65
      %s83 = sphi 0, %s83
      %s85 = sphi 0, %s83
      %s86 = sphi 0, %s85
      %s100 = sphi 0, %s86
      %s104 = sphi 0, %s104
      %s106 = sphi 0, %s104
      %s107 = sphi 0, %s106
      %s121 = sphi 0, %s107
      %s125 = sphi 0, %s125
      %s127 = sphi 0, %s125
      %s128 = sphi 0, %s127
      %s142 = sphi 0, %s128
      %s150 = sphi 0, %s152
      %s153 = sphi 0, %s150
      %s154 = sphi 0, %s153
      %s170 = sphi 0, %s154
    $region4: #{tpu_custom_call.1} parent=1 // loop_header_branch
      %17 = sbr.rel (%p15) target = $region8
    $region5: #{tpu_custom_call.1} parent=1 // loop_body
      %s19 = ssub.s32 %s14, 1
      %s20 = ssub.s32 %s14, 2
      %s27 = sadd.s32 1, %s22
      %p28 = scmp.ge.s32.totalorder %s27, 1
      %s29 = scalar_select %p28, 0, %s27
      %s30 = sadd.s32 1, %s21
      %s31 = scalar_select %p28, %s30, %s21
      %p32 = scmp.ge.s32.totalorder %s31, 2
      %s33 = scalar_select %p32, 0, %s31
      %s34 = ssub.s32 %s21, %s33
      %s35 = ssub.s32 %s22, %s29
      %s36 = sor.u32 %s34, %s35
      %p37 = scmp.eq.s32.totalorder %s36, 0
      %s39 = sadd.s32 %s38, 1
      %s40 = scalar_select %p37, %s38, %s39
      %p43 = pneg %p37
      %p44 = scmp.eq.s32.totalorder %s14, 1
      %p45 = por %p43, %p44
      %p46 = scmp.ne.s32.totalorder %s38, %s41
      %p47 = scmp.eq.s32.totalorder %s14, 0
      %p48 = por %p46, %p47
      %p49 = scmp.ne.s32.totalorder %s38, %s41
      %p50 = scmp.eq.s32.totalorder %s19, 1
      %p51 = por %p49, %p50
      %p52 = scmp.ne.s32.totalorder %s41, %s42
      %p53 = scmp.eq.s32.totalorder %s19, 0
      %p54 = por %p52, %p53
      %p55 = scmp.ne.s32.totalorder %s41, %s42
      %p56 = scmp.eq.s32.totalorder %s20, 1
      %p57 = por %p55, %p56
      %p59 = scmp.ne.s32.totalorder %s42, %s58
      %p60 = scmp.eq.s32.totalorder %s20, 0
      %p61 = por %p59, %p60
      %s63 = sadd.s32 %s62, 1
      %p66 = scmp.eq.s32.totalorder %s14, 1
      %p67 = scmp.ne.s32.totalorder %s62, %s64
      %p68 = scmp.eq.s32.totalorder %s14, 0
      %p69 = por %p67, %p68
      %p70 = scmp.ne.s32.totalorder %s62, %s64
      %p71 = scmp.eq.s32.totalorder %s19, 1
      %p72 = por %p70, %p71
      %p73 = scmp.ne.s32.totalorder %s64, %s65
      %p74 = scmp.eq.s32.totalorder %s19, 0
      %p75 = por %p73, %p74
      %p76 = scmp.ne.s32.totalorder %s64, %s65
      %p77 = scmp.eq.s32.totalorder %s20, 1
      %p78 = por %p76, %p77
      %p80 = scmp.ne.s32.totalorder %s65, %s79
      %p81 = scmp.eq.s32.totalorder %s20, 0
      %p82 = por %p80, %p81
      %s84 = sadd.s32 %s83, 1
      %p87 = scmp.eq.s32.totalorder %s14, 1
      %p88 = scmp.ne.s32.totalorder %s83, %s85
      %p89 = scmp.eq.s32.totalorder %s14, 0
      %p90 = por %p88, %p89
      %p91 = scmp.ne.s32.totalorder %s83, %s85
      %p92 = scmp.eq.s32.totalorder %s19, 1
      %p93 = por %p91, %p92
      %p94 = scmp.ne.s32.totalorder %s85, %s86
      %p95 = scmp.eq.s32.totalorder %s19, 0
      %p96 = por %p94, %p95
      %p97 = scmp.ne.s32.totalorder %s85, %s86
      %p98 = scmp.eq.s32.totalorder %s20, 1
      %p99 = por %p97, %p98
      %p101 = scmp.ne.s32.totalorder %s86, %s100
      %p102 = scmp.eq.s32.totalorder %s20, 0
      %p103 = por %p101, %p102
      %s105 = sadd.s32 %s104, 1
      %p108 = scmp.eq.s32.totalorder %s14, 1
      %p109 = scmp.ne.s32.totalorder %s104, %s106
      %p110 = scmp.eq.s32.totalorder %s14, 0
      %p111 = por %p109, %p110
      %p112 = scmp.ne.s32.totalorder %s104, %s106
      %p113 = scmp.eq.s32.totalorder %s19, 1
      %p114 = por %p112, %p113
      %p115 = scmp.ne.s32.totalorder %s106, %s107
      %p116 = scmp.eq.s32.totalorder %s19, 0
      %p117 = por %p115, %p116
      %p118 = scmp.ne.s32.totalorder %s106, %s107
      %p119 = scmp.eq.s32.totalorder %s20, 1
      %p120 = por %p118, %p119
      %p122 = scmp.ne.s32.totalorder %s107, %s121
      %p123 = scmp.eq.s32.totalorder %s20, 0
      %p124 = por %p122, %p123
      %s126 = sadd.s32 %s125, 1
      %p129 = scmp.eq.s32.totalorder %s14, 1
      %p130 = scmp.ne.s32.totalorder %s125, %s127
      %p131 = scmp.eq.s32.totalorder %s14, 0
      %p132 = por %p130, %p131
      %p133 = scmp.ne.s32.totalorder %s125, %s127
      %p134 = scmp.eq.s32.totalorder %s19, 1
      %p135 = por %p133, %p134
      %p136 = scmp.ne.s32.totalorder %s127, %s128
      %p137 = scmp.eq.s32.totalorder %s19, 0
      %p138 = por %p136, %p137
      %p139 = scmp.ne.s32.totalorder %s127, %s128
      %p140 = scmp.eq.s32.totalorder %s20, 1
      %p141 = por %p139, %p140
      %p143 = scmp.ne.s32.totalorder %s128, %s142
      %p144 = scmp.eq.s32.totalorder %s20, 0
      %p145 = por %p143, %p144
      %s146 = ssub.s32 %s21, %s33
      %s147 = ssub.s32 %s22, %s29
      %s148 = sor.u32 %s146, %s147
      %p149 = scmp.eq.s32.totalorder %s148, 0
      %s151 = sadd.s32 %s150, 1
      %s152 = scalar_select %p149, %s150, %s151
      %p155 = pneg %p149
      %p156 = scmp.eq.s32.totalorder %s14, 1
      %p157 = por %p155, %p156
      %p158 = scmp.ne.s32.totalorder %s150, %s153
      %p159 = scmp.eq.s32.totalorder %s14, 0
      %p160 = por %p158, %p159
      %p161 = scmp.ne.s32.totalorder %s150, %s153
      %p162 = scmp.eq.s32.totalorder %s19, 1
      %p163 = por %p161, %p162
      %p164 = scmp.ne.s32.totalorder %s153, %s154
      %p165 = scmp.eq.s32.totalorder %s19, 0
      %p166 = por %p164, %p165
      %p167 = scmp.ne.s32.totalorder %s153, %s154
      %p168 = scmp.eq.s32.totalorder %s20, 1
      %p169 = por %p167, %p168
      %p171 = scmp.ne.s32.totalorder %s154, %s170
      %p172 = scmp.eq.s32.totalorder %s20, 0
      %p173 = por %p171, %p172
      %p174 = scmp.le.s32.totalorder 1, %s14
      %p175 = scmp.lt.s32.totalorder %s14, 3
      %p176 = pnand %p174, %p175
      %p177 = pneg %p176
      // Predicated region
      $region9: #{tpu_custom_call.1} parent=5 // pred_check
        _
      $region10: #{tpu_custom_call.1} parent=5 // pred_check_branch
        %179 = sbr.rel (%p176) target = $region12
      $region11: #{tpu_custom_call.1} parent=5 // pred_region
        %s180 = ssub.s32 %s14, 1
        // Predicated region
        $region13: #{tpu_custom_call.1} parent=11 // pred_check
          %p181 = pneg %p75
        $region14: #{tpu_custom_call.1} parent=11 // pred_check_branch
          %183 = sbr.rel (%p181) target = $region16
        $region15: #{tpu_custom_call.1} parent=11 // pred_region
          _
        $region16: #{tpu_custom_call.1} parent=11 // pred_fallthru
          _
        // Predicated region
        $region17: #{tpu_custom_call.1} parent=11 // pred_check
          %p184 = pneg %p96
        $region18: #{tpu_custom_call.1} parent=11 // pred_check_branch
          %186 = sbr.rel (%p184) target = $region20
        $region19: #{tpu_custom_call.1} parent=11 // pred_region
          _
        $region20: #{tpu_custom_call.1} parent=11 // pred_fallthru
          _
        // Predicated region
        $region21: #{tpu_custom_call.1} parent=11 // pred_check
          %p187 = pneg %p117
        $region22: #{tpu_custom_call.1} parent=11 // pred_check_branch
          %189 = sbr.rel (%p187) target = $region24
        $region23: #{tpu_custom_call.1} parent=11 // pred_region
          _
        $region24: #{tpu_custom_call.1} parent=11 // pred_fallthru
          _
        // Predicated region
        $region25: #{tpu_custom_call.1} parent=11 // pred_check
          %p190 = pneg %p138
        $region26: #{tpu_custom_call.1} parent=11 // pred_check_branch
          %192 = sbr.rel (%p190) target = $region28
        $region27: #{tpu_custom_call.1} parent=11 // pred_region
          _
        $region28: #{tpu_custom_call.1} parent=11 // pred_fallthru
          _
      $region12: #{tpu_custom_call.1} parent=5 // pred_fallthru
        _
      %p193 = scmp.lt.s32.totalorder %s14, 2
      // Predicated region
      $region29: #{tpu_custom_call.1} parent=5 // pred_check
        %p194 = pneg %p193
      $region30: #{tpu_custom_call.1} parent=5 // pred_check_branch
        %196 = sbr.rel (%p194) target = $region32
      $region31: #{tpu_custom_call.1} parent=5 // pred_region
        // Predicated region
        $region33: #{tpu_custom_call.1} parent=31 // pred_check
          %p197 = pneg %p48
        $region34: #{tpu_custom_call.1} parent=31 // pred_check_branch
          %199 = sbr.rel (%p197) target = $region36
        $region35: #{tpu_custom_call.1} parent=31 // pred_region
          %s200 = smul.u32 2, %s22
          %p201 = scmp.lt.s32.totalorder %s21, 1
          %s202 = scalar_select %p201, %s21, 1
          %p203 = scmp.lt.s32.totalorder %s200, 1
          %s204 = scalar_select %p203, %s200, 1
          %s205 = smul.addr %s202, 2
          %s206 = sadd.s32 %s204, %s205
          %s207 = smul.addr %s206, 8
          %s208 = scalar_lea.vmem %s0, %s207
          %s209 = smul.u32 2, %s22
        $region36: #{tpu_custom_call.1} parent=31 // pred_fallthru
          _
      $region32: #{tpu_custom_call.1} parent=5 // pred_fallthru
        _
      %p210 = scmp.le.s32.totalorder 1, %s14
      %p211 = scmp.lt.s32.totalorder %s14, 3
      %p212 = pnand %p210, %p211
      %p213 = pneg %p212
      // Predicated region
      $region37: #{tpu_custom_call.1} parent=5 // pred_check
        _
      $region38: #{tpu_custom_call.1} parent=5 // pred_check_branch
        %215 = sbr.rel (%p212) target = $region40
      $region39: #{tpu_custom_call.1} parent=5 // pred_region
        %s216 = ssub.s32 %s14, 1
        %s217 = smul.u32 2, %s24
        %p218 = scmp.lt.s32.totalorder %s23, 1
        %s219 = scalar_select %p218, %s23, 1
        %p220 = scmp.lt.s32.totalorder %s217, 1
        %s221 = scalar_select %p220, %s217, 1
        %s222 = smul.addr %s219, 2
        %s223 = sadd.s32 %s221, %s222
        %s224 = smul.addr %s223, 8
        %s225 = scalar_lea.vmem %s0, %s224
        %p226 = pneg %p54
        %p227 = pneg %p51
        %p228 = pneg %p75
        %p229 = pneg %p72
        %p230 = pneg %p96
        %p231 = pneg %p93
        %p232 = pneg %p117
        %p233 = pneg %p114
        %p234 = pneg %p138
        %p235 = pneg %p135
        %p236 = pneg %p166
        %p237 = pneg %p163
        %s238 = sand.u32 %s153, 1
        %s239 = scalar_lea.sflag [#allocation3], %s238
        %s240 = sand.u32 %s153, 1
        %s241 = smul.addr %s240, 8
        %s242 = scalar_lea.vmem [#allocation2], %s241
        %s243 = smul.u32 2, %s24
        %p244 = scmp.lt.s32.totalorder %s23, 1
        %s245 = scalar_select %p244, %s23, 1
        %p246 = scmp.lt.s32.totalorder %s243, 1
        %s247 = scalar_select %p246, %s243, 1
        %s248 = smul.addr %s245, 2
        %s249 = sadd.s32 %s247, %s248
        %s250 = smul.addr %s249, 8
        %s251 = scalar_lea.vmem %s0, %s250
        %s252 = smul.u32 2, %s24
        %s253 = smul.u32 2, %s24
        %v254 = vld [vmem:[%s251] sm:$0xff]
        %v255 = vld [vmem:[%s251 + $0x8] sm:$0xff]
        %v256 = vmax.f32 %v254, 0.0
        %v257 = vmax.f32 %v255, 0.0
        %v258 = vld [vmem:[%s1] sm:$0xff]
        %v259 = vld [vmem:[%s1 + $0x8] sm:$0xff]
        %v260 = vld [vmem:[%s2] sm:$0xff]
        %v261 = vld [vmem:[%s2 + $0x8] sm:$0xff]
        %263 = vset.pattern.permute.xlu0 0
        %264 = vperm.xlu0 %263, %v260
        %v265 = vpop.permute.xlu0 %264
        %268 = vset.pattern.permute.xlu0 0
        %269 = vperm.xlu0 %268, %v261
        %v270 = vpop.permute.xlu0 %269
        %vm272 = vcmask 64512
        %v274 = vsel %vm272, %v258, 0
        %v277 = vsel %vm272, %v259, 0
        %279 = vmatprep.subr.mxu0 0.0
        %280 = vmatpush1.msra.mxu0 0.0
        %281 = vmatprep.subr.mxu0 0.0
        %282 = vmatpush1.msra.mxu0 0.0
        %283 = vmatprep.subr.mxu0 0.0
        %284 = vmatpush1.msra.mxu0 0.0
        %285 = vmatprep.subr.mxu0 0.0
        %286 = vmatpush1.msra.mxu0 0.0
        %287 = vmatprep.subr.mxu0 0.0
        %288 = vmatpush1.msra.mxu0 0.0
        %289 = vmatprep.subr.mxu0 0.0
        %290 = vmatpush1.msra.mxu0 0.0
        %291 = vmatprep.subr.mxu0 0.0
        %292 = vmatpush1.msra.mxu0 0.0
        %293 = vmatprep.subr.mxu0 0.0
        %294 = vmatpush1.msra.mxu0 0.0
        %295 = vmatprep.subr.mxu0 0.0
        %296 = vmatpush1.msra.mxu0 0.0
        %297 = vmatprep.subr.mxu0 0.0
        %298 = vmatpush1.msra.mxu0 0.0
        %299 = vmatprep.subr.mxu0 0.0
        %300 = vmatpush1.msra.mxu0 0.0
        %301 = vmatprep.subr.mxu0 0.0
        %302 = vmatpush1.msra.mxu0 0.0
        %303 = vmatprep.subr.mxu0 0.0
        %304 = vmatpush1.msra.mxu0 0.0
        %305 = vmatprep.subr.mxu0 0.0
        %306 = vmatpush1.msra.mxu0 0.0
        %307 = vmatprep.subr.mxu0 0.0
        %308 = vmatpush1.msra.mxu0 0.0
        %309 = vmatprep.subr.mxu0 %v257
        %310 = vmatpush1.msra.mxu0 %v256
        %311 = vmatprep.subr.mxu0 0.0
        %312 = vmatpush2.msra.mxu0 0.0
        %313 = vmatprep.subr.mxu0 0.0
        %314 = vmatpush2.msra.mxu0 0.0
        %315 = vmatprep.subr.mxu0 0.0
        %316 = vmatpush2.msra.mxu0 0.0
        %317 = vmatprep.subr.mxu0 0.0
        %318 = vmatpush2.msra.mxu0 0.0
        %319 = vmatprep.subr.mxu0 0.0
        %320 = vmatpush2.msra.mxu0 0.0
        %321 = vmatprep.subr.mxu0 0.0
        %322 = vmatpush2.msra.mxu0 0.0
        %323 = vmatprep.subr.mxu0 0.0
        %324 = vmatpush2.msra.mxu0 0.0
        %325 = vmatprep.subr.mxu0 0.0
        %326 = vmatpush2.msra.mxu0 0.0
        %327 = vmatprep.subr.mxu0 0.0
        %328 = vmatpush2.msra.mxu0 0.0
        %329 = vmatprep.subr.mxu0 0.0
        %330 = vmatpush2.msra.mxu0 0.0
        %331 = vmatprep.subr.mxu0 0.0
        %332 = vmatpush2.msra.mxu0 0.0
        %333 = vmatprep.subr.mxu0 0.0
        %334 = vmatpush2.msra.mxu0 0.0
        %335 = vmatprep.subr.mxu0 0.0
        %336 = vmatpush2.msra.mxu0 0.0
        %337 = vmatprep.subr.mxu0 0.0
        %338 = vmatpush2.msra.mxu0 0.0
        %339 = vmatprep.subr.mxu0 0.0
        %340 = vmatpush2.msra.mxu0 0.0
        %341 = vmatprep.subr.mxu0 0.0
        %342 = vmatpush2.msra.mxu0 0.0
        %343 = vmatprep.mubr.f32.mxu0 0.0
        %344 = vmatmul.mubr.f32.gmra.mxu0 %v274
        %v345 = vpop.f32.mrf.mxu0
        %v346 = vadd.f32 %v265, %v345
        %v347 = vpop.f32.mrf.mxu0
        %v348 = vadd.f32 %v265, %v347
        %349 = vmatprep.mubr.f32.mxu0 0.0
        %350 = vmatmul.mubr.f32.gmra.mxu0 %v277
        %v351 = vpop.f32.mrf.mxu0
        %v352 = vadd.f32 %v270, %v351
        %v353 = vpop.f32.mrf.mxu0
        %v354 = vadd.f32 %v270, %v353
        %355 = vdwg.mxu0
        %v356 = vmax.f32 %v346, 0.0
        %v357 = vmax.f32 %v348, 0.0
        %v358 = vmax.f32 %v352, 0.0
        %v359 = vmax.f32 %v354, 0.0
        %v360 = vld [vmem:[%s3] sm:$0xf]
        %v361 = vld [vmem:[%s4] sm:$0xf]
        %363 = vset.pattern.permute.xlu0 0
        %364 = vperm.xlu0 %363, %v361
        %v365 = vpop.permute.xlu0 %364
        %vm367 = vcmask 130048
        %v369 = vsel %vm367, %v360, 0
        %371 = vmatprep.subr.mxu0 0.0
        %372 = vmatpush1.msra.mxu0 0.0
        %373 = vmatprep.subr.mxu0 0.0
        %374 = vmatpush1.msra.mxu0 0.0
        %375 = vmatprep.subr.mxu0 0.0
        %376 = vmatpush1.msra.mxu0 0.0
        %377 = vmatprep.subr.mxu0 0.0
        %378 = vmatpush1.msra.mxu0 0.0
        %379 = vmatprep.subr.mxu0 0.0
        %380 = vmatpush1.msra.mxu0 0.0
        %381 = vmatprep.subr.mxu0 0.0
        %382 = vmatpush1.msra.mxu0 0.0
        %383 = vmatprep.subr.mxu0 0.0
        %384 = vmatpush1.msra.mxu0 0.0
        %385 = vmatprep.subr.mxu0 0.0
        %386 = vmatpush1.msra.mxu0 0.0
        %387 = vmatprep.subr.mxu0 0.0
        %388 = vmatpush1.msra.mxu0 0.0
        %389 = vmatprep.subr.mxu0 0.0
        %390 = vmatpush1.msra.mxu0 0.0
        %391 = vmatprep.subr.mxu0 0.0
        %392 = vmatpush1.msra.mxu0 0.0
        %393 = vmatprep.subr.mxu0 0.0
        %394 = vmatpush1.msra.mxu0 0.0
        %395 = vmatprep.subr.mxu0 0.0
        %396 = vmatpush1.msra.mxu0 0.0
        %397 = vmatprep.subr.mxu0 0.0
        %398 = vmatpush1.msra.mxu0 0.0
        %399 = vmatprep.subr.mxu0 %v359
        %400 = vmatpush1.msra.mxu0 %v358
        %401 = vmatprep.subr.mxu0 %v357
        %402 = vmatpush1.msra.mxu0 %v356
        %403 = vmatprep.subr.mxu0 0.0
        %404 = vmatpush2.msra.mxu0 0.0
        %405 = vmatprep.subr.mxu0 0.0
        %406 = vmatpush2.msra.mxu0 0.0
        %407 = vmatprep.subr.mxu0 0.0
        %408 = vmatpush2.msra.mxu0 0.0
        %409 = vmatprep.subr.mxu0 0.0
        %410 = vmatpush2.msra.mxu0 0.0
        %411 = vmatprep.subr.mxu0 0.0
        %412 = vmatpush2.msra.mxu0 0.0
        %413 = vmatprep.subr.mxu0 0.0
        %414 = vmatpush2.msra.mxu0 0.0
        %415 = vmatprep.subr.mxu0 0.0
        %416 = vmatpush2.msra.mxu0 0.0
        %417 = vmatprep.subr.mxu0 0.0
        %418 = vmatpush2.msra.mxu0 0.0
        %419 = vmatprep.subr.mxu0 0.0
        %420 = vmatpush2.msra.mxu0 0.0
        %421 = vmatprep.subr.mxu0 0.0
        %422 = vmatpush2.msra.mxu0 0.0
        %423 = vmatprep.subr.mxu0 0.0
        %424 = vmatpush2.msra.mxu0 0.0
        %425 = vmatprep.subr.mxu0 0.0
        %426 = vmatpush2.msra.mxu0 0.0
        %427 = vmatprep.subr.mxu0 0.0
        %428 = vmatpush2.msra.mxu0 0.0
        %429 = vmatprep.subr.mxu0 0.0
        %430 = vmatpush2.msra.mxu0 0.0
        %431 = vmatprep.subr.mxu0 0.0
        %432 = vmatpush2.msra.mxu0 0.0
        %433 = vmatprep.subr.mxu0 0.0
        %434 = vmatpush2.msra.mxu0 0.0
        %435 = vmatprep.mubr.f32.mxu0 0.0
        %436 = vmatmul.mubr.f32.gmra.mxu0 %v369
        %v437 = vpop.f32.mrf.mxu0
        %v438 = vadd.f32 %v365, %v437
        %v439 = vpop.f32.mrf.mxu0
        %v440 = vadd.f32 %v365, %v439
        %441 = vdwg.mxu0
        %v442 = vxor.u32 %v438, 2147483648
        %v443 = vxor.u32 %v440, 2147483648
        %v444 = vmul.f32 %v442, 1.442695
        %v445 = vpow.pop %v444
        %v446 = vmul.f32 %v443, 1.442695
        %v447 = vpow.pop %v446
        %v448 = vadd.f32 %v445, 1.0
        %v449 = vadd.f32 %v447, 1.0
        %v450 = vrcp.pop %v448
        %v451 = vmul.f32 1.0, %v450
        %v452 = vrcp.pop %v449
        %v453 = vmul.f32 1.0, %v452
        %v456 = vcombine.low %v451, %v453
        %458 = vst [vmem:[%s242] sm:$0xff] %v456
        %s459 = sand.u32 %s153, 1
        %s460 = scalar_lea.sflag [#allocation3], %s459
        %s461 = sand.u32 %s153, 1
        %s462 = smul.addr %s461, 8
        %s463 = scalar_lea.vmem [#allocation2], %s462
        // Predicated region
        $region41: #{tpu_custom_call.1} parent=39 // pred_check
          %p464 = pneg %p163
        $region42: #{tpu_custom_call.1} parent=39 // pred_check_branch
          %466 = sbr.rel (%p464) target = $region44
        $region43: #{tpu_custom_call.1} parent=39 // pred_region
          %s467 = smul.u32 2, %s24
          %s469 = ssub.s32 128, 128
          %470 = vsyncadd %s460, %s469
          %s471 = smul.addr %s23, 2
          %s472 = sadd.s32 %s467, %s471
          %s473 = smul.addr %s472, 64
          %s474 = scalar_lea.hbm %s5, %s473
          %s476 = sshll.u32 %s463, 4
          %s477 = int_to_ptr.vmem [resolvable:$true] %s476
          %479 = dma.vmem_to_hbm [thread:$0]  %s477, 128, %s474, %s460
        $region44: #{tpu_custom_call.1} parent=39 // pred_fallthru
          _
      $region40: #{tpu_custom_call.1} parent=5 // pred_fallthru
        _
      %p480 = scmp.le.s32.totalorder 2, %s14
      // Predicated region
      $region45: #{tpu_custom_call.1} parent=5 // pred_check
        %p481 = pneg %p480
      $region46: #{tpu_custom_call.1} parent=5 // pred_check_branch
        %483 = sbr.rel (%p481) target = $region48
      $region47: #{tpu_custom_call.1} parent=5 // pred_region
        %s484 = ssub.s32 %s14, 2
        // Predicated region
        $region49: #{tpu_custom_call.1} parent=47 // pred_check
          %p485 = pneg %p169
        $region50: #{tpu_custom_call.1} parent=47 // pred_check_branch
          %487 = sbr.rel (%p485) target = $region52
        $region51: #{tpu_custom_call.1} parent=47 // pred_region
          %s488 = sand.u32 %s154, 1
          %s489 = scalar_lea.sflag [#allocation3], %s488
          %s490 = sand.u32 %s154, 1
          %s491 = smul.addr %s490, 8
          %s492 = scalar_lea.vmem [#allocation2], %s491
          %493 = dma.done %s489, 128
        $region52: #{tpu_custom_call.1} parent=47 // pred_fallthru
          _
      $region48: #{tpu_custom_call.1} parent=5 // pred_fallthru
        _
    $region6: #{tpu_custom_call.1} parent=1 // loop_footer
      %s18 = sadd.s32 1, %s14
    $region7: #{tpu_custom_call.1} parent=1 // loop_footer_branch
      %13 = sbr.rel target = $region3
    $region8: #{tpu_custom_call.1} parent=1 // loop_exit
      _
    %494 = vsyncpa [#allocation3], 1
    %s495 = scalar_lea.sflag [#allocation3], 1
    %496 = vsyncpa %s495, 1

</llo_original>
